<compile_context>
chip_gen: v7x
topology: tpu7x:2x2x1
jax: 0.10.0
libtpu: 0.0.40
codegen_flags: <defaults>
</compile_context>

<pallas_src>
import jax
import jax.numpy as jnp
import numpy as np
from jax.experimental import pallas as pl
from jax.experimental.pallas import tpu as pltpu


def _round_up(x: int, m: int) -> int:
    return ((x + m - 1) // m) * m


def _pad_last(a, target):
    pad = target - a.shape[-1]
    if pad == 0:
        return a
    return jnp.pad(a, [(0, 0)] * (a.ndim - 1) + [(0, pad)])


# ----------------------------- linear projection kernel -----------------------------
def _linear_kernel(x_ref, w_ref, b_ref, o_ref):
    acc = jnp.dot(x_ref[...], w_ref[...], preferred_element_type=jnp.float32)
    o_ref[...] = (acc + b_ref[...]).astype(o_ref.dtype)


def linear(x, w, b, *, tm=512, out_dtype=None):
    """x: [M, K] @ w: [K, N] + b: [N] -> [M, N].  Tiled over M (pipelined, megacore-parallel)."""
    M, K = x.shape
    N = w.shape[1]
    out_dtype = np.dtype(out_dtype) if out_dtype is not None else np.dtype(x.dtype)
    tm = _round_up(max(8, min(tm, _round_up(M, 8))), 8)
    Mp = _round_up(M, tm)
    if Mp != M:
        x = jnp.pad(x, ((0, Mp - M), (0, 0)))
    out = pl.pallas_call(
        _linear_kernel,
        out_shape=jax.ShapeDtypeStruct((Mp, N), out_dtype),
        grid_spec=pltpu.PrefetchScalarGridSpec(
            num_scalar_prefetch=0,
            grid=(Mp // tm,),
            in_specs=[
                pl.BlockSpec((tm, K), lambda i: (i, 0)),
                pl.BlockSpec((K, N), lambda i: (0, 0)),   # constant block -> no re-DMA
                pl.BlockSpec((1, N), lambda i: (0, 0)),
            ],
            out_specs=pl.BlockSpec((tm, N), lambda i: (i, 0)),
        ),
        compiler_params=pltpu.CompilerParams(
            dimension_semantics=("parallel",),
        ),
    )(x, w, b.reshape(1, N))
    return out[:M] if Mp != M else out


# ------------------------------ joint (hot path) --------------------------------
def _joint_kernel(enc_ref, pred_ref, w_ref, b_ref, o_ref, act_ref):
    # enc_ref:  [1, tt, J]    pred_ref: [1, tu, J]
    # w_ref:    [J, tv]       b_ref:    [1, tv]  (f32)
    # o_ref:    [1, tt, tu, tv]
    # act_ref:  [tt*tu, J] VMEM scratch holding tanh(enc + pred), reused across V tiles.
    tt, tu, tv = o_ref.shape[1], o_ref.shape[2], o_ref.shape[3]

    @pl.when(pl.program_id(3) == 0)
    def _():
        enc = enc_ref[0]                              # [tt, J]
        pred = pred_ref[0]                            # [tu, J]
        joint = enc[:, None, :] + pred[None, :, :]    # [tt, tu, J] broadcast add (VPU)
        act_ref[...] = jnp.tanh(joint).reshape(tt * tu, enc.shape[-1])  # tanh on EUP

    logits = jnp.dot(act_ref[...], w_ref[...], preferred_element_type=jnp.float32)
    logits = logits + b_ref[...]
    o_ref[0] = logits.reshape(tt, tu, tv).astype(o_ref.dtype)


def transducer_joint_add(enc, pred, w_out, b_out, *, tt=64, tu=64, tv=512,
                         out_dtype=None, compute_dtype=None):
    """enc:  [B, T, J] (lin_enc-projected), pred: [B, U, J] (lin_dec-projected).
       w_out: [J, V], b_out: [V] with J, V multiples of 128 (pad upstream).
       Returns logits [B, T, U, V] in out_dtype."""
    B, T, J = enc.shape
    _, U, _ = pred.shape
    Jw, V = w_out.shape
    assert Jw == J and J % 128 == 0 and V % 128 == 0, "pad J and V to multiples of 128"

    out_dtype = np.dtype(out_dtype) if out_dtype is not None else np.dtype(enc.dtype)
    compute_dtype = np.dtype(compute_dtype) if compute_dtype is not None else np.dtype(enc.dtype)

    # Tile selection: big tiles (MXU-filling, low per-step overhead), sublane-aligned for the
    # narrowest dtype involved, clamped down for short T/U and small V.
    sub = 16 if min(out_dtype.itemsize, compute_dtype.itemsize) < 4 else 8
    tt = _round_up(max(sub, min(tt, _round_up(T, sub))), sub)
    tu = _round_up(max(sub, min(tu, _round_up(U, sub))), sub)
    tv = max(128, (min(tv, V) // 128) * 128)
    while V % tv:
        tv -= 128

    csz, osz = compute_dtype.itemsize, out_dtype.itemsize

    def _vmem_est(_tt, _tu, _tv):
        return (2 * (_tt + _tu) * J * csz       # enc/pred, double-buffered
                + 2 * J * _tv * csz             # w tile, double-buffered
                + 2 * _tv * 4                   # bias tile
                + 2 * _tt * _tu * _tv * osz     # output tile, double-buffered
                + _tt * _tu * J * csz)          # activation scratch

    # Adaptively shrink tiles so we stay within a conservative budget (v7x VMEM is 64 MiB).
    VMEM_BUDGET = 40 * 1024 * 1024
    while _vmem_est(tt, tu, tv) > VMEM_BUDGET:
        if tu > sub:
            tu = max(sub, ((tu // 2) // sub) * sub)
        elif tt > sub:
            tt = max(sub, ((tt // 2) // sub) * sub)
        elif tv > 128:
            tv = max(128, ((tv // 2) // 128) * 128)
            while V % tv:
                tv -= 128
        else:
            break

    Tp, Up = _round_up(T, tt), _round_up(U, tu)
    enc = enc.astype(compute_dtype)
    pred = pred.astype(compute_dtype)
    if Tp != T:
        enc = jnp.pad(enc, ((0, 0), (0, Tp - T), (0, 0)))
    if Up != U:
        pred = jnp.pad(pred, ((0, 0), (0, Up - U), (0, 0)))
    w = w_out.astype(compute_dtype)
    b = b_out.astype(jnp.float32).reshape(1, V)

    grid = (B, Tp // tt, Up // tu, V // tv)

    vmem_limit = int(min(max(int(1.5 * _vmem_est(tt, tu, tv)), 32 * 1024 * 1024),
                         56 * 1024 * 1024))

    out = pl.pallas_call(
        _joint_kernel,
        out_shape=jax.ShapeDtypeStruct((B, Tp, Up, V), out_dtype),
        grid_spec=pltpu.PrefetchScalarGridSpec(
            num_scalar_prefetch=0,
            grid=grid,
            in_specs=[
                pl.BlockSpec((1, tt, J), lambda bb, ii, jj, vv: (bb, ii, 0)),
                pl.BlockSpec((1, tu, J), lambda bb, ii, jj, vv: (bb, jj, 0)),
                pl.BlockSpec((J, tv), lambda bb, ii, jj, vv: (0, vv)),
                pl.BlockSpec((1, tv), lambda bb, ii, jj, vv: (0, vv)),
            ],
            out_specs=pl.BlockSpec((1, tt, tu, tv), lambda bb, ii, jj, vv: (bb, ii, jj, vv)),
            scratch_shapes=[pltpu.VMEM((tt * tu, J), compute_dtype)],
        ),
        compiler_params=pltpu.CompilerParams(
            # V axis is "arbitrary" so the act scratch computed at vv==0 is reused sequentially.
            dimension_semantics=("parallel", "parallel", "parallel", "arbitrary"),
            vmem_limit_bytes=vmem_limit,
        ),
    )(enc, pred, w, b)

    if Tp != T or Up != U:
        out = out[:, :T, :U, :]
    return out


# --------------------------------- module glue -----------------------------------
def init_linear_params(key, fan_in, fan_out, dtype=jnp.float32):
    # Deterministic init mimicking torch.nn.Linear (uniform(-1/sqrt(fan_in), 1/sqrt(fan_in))).
    kw, kb = jax.random.split(key)
    bound = 1.0 / jnp.sqrt(jnp.array(fan_in, dtype))
    w = jax.random.uniform(kw, (fan_in, fan_out), dtype, -bound, bound)  # stored [in, out]
    b = jax.random.uniform(kb, (fan_out,), dtype, -bound, bound)
    return w, b


def transducer_joint_forward(params, encoder_outputs, predictor_outputs,
                             *, out_dtype=None, compute_dtype=None,
                             tt=64, tu=64, tv=512):
    """Equivalent of TransducerJoint(joint_type='add').forward.
       encoder_outputs: [B, T, E], predictor_outputs: [B, U, P] -> [B, T, U, V].
       out_dtype / compute_dtype default to the input dtype; pass jnp.bfloat16 for the
       write-bandwidth-optimized path (f32 MXU accumulation is always kept)."""
    # TODO(synk): joint_type='concat' path (f1 Linear over concatenated features) not implemented;
    #             this script implements the default 'add' path.
    (we, be), (wd, bd), (wo, bo) = params
    B, T, E = encoder_outputs.shape
    _, U, P = predictor_outputs.shape
    J = we.shape[1]
    V = wo.shape[1]

    compute_dtype = compute_dtype if compute_dtype is not None else encoder_outputs.dtype
    out_dtype = out_dtype if out_dtype is not None else encoder_outputs.dtype

    # Lane-dense padding of feature dims (zero pads contribute exactly 0 through tanh/matmul).
    Jp, Vp = _round_up(J, 128), _round_up(V, 128)
    we_p, be_p = _pad_last(we, Jp), _pad_last(be, Jp)
    wd_p, bd_p = _pad_last(wd, Jp), _pad_last(bd, Jp)
    wo_p = _pad_last(jnp.pad(wo, ((0, Jp - J), (0, 0))), Vp)
    bo_p = _pad_last(bo, Vp)

    enc_proj = linear(encoder_outputs.reshape(B * T, E), we_p, be_p,
                      out_dtype=compute_dtype).reshape(B, T, Jp)
    pred_proj = linear(predictor_outputs.reshape(B * U, P), wd_p, bd_p,
                       out_dtype=compute_dtype).reshape(B, U, Jp)

    logits = transducer_joint_add(enc_proj, pred_proj, wo_p, bo_p,
                                  tt=tt, tu=tu, tv=tv,
                                  out_dtype=out_dtype, compute_dtype=compute_dtype)
    return logits[..., :V] if Vp != V else logits


def reference_forward(params, encoder_outputs, predictor_outputs):
    (we, be), (wd, bd), (wo, bo) = params
    enc = encoder_outputs @ we + be          # [B, T, J]
    pred = predictor_outputs @ wd + bd       # [B, U, J]
    joint = enc[:, :, None, :] + pred[:, None, :, :]
    return jnp.tanh(joint) @ wo + bo


if __name__ == "__main__":
    # Small shapes consistent with the module's forward; J and V deliberately NOT multiples
    # of 128 to exercise the lane-dense padding path.
    B, T, U = 2, 16, 8
    enc_output_size, pred_output_size = 64, 64
    joint_dim, vocab_size = 96, 100

    key = jax.random.PRNGKey(0)
    k_enc, k_dec, k_out, k_x, k_y = jax.random.split(key, 5)

    lin_enc = init_linear_params(k_enc, enc_output_size, joint_dim)
    lin_dec = init_linear_params(k_dec, pred_output_size, joint_dim)
    out_pro = init_linear_params(k_out, joint_dim, vocab_size)
    params = (lin_enc, lin_dec, out_pro)

    encoder_outputs = jax.random.normal(k_x, (B, T, enc_output_size), jnp.float32)
    predictor_outputs = jax.random.normal(k_y, (B, U, pred_output_size), jnp.float32)

    ref = reference_forward(params, encoder_outputs, predictor_outputs)

    # f32 path (tight check vs reference).
    logits = transducer_joint_forward(params, encoder_outputs, predictor_outputs)
    logits = jax.block_until_ready(logits)
    assert logits.shape == (B, T, U, vocab_size), logits.shape
    assert jnp.allclose(logits, ref, atol=1e-4, rtol=1e-4), "f32 mismatch vs JAX reference"

    # bf16 fast path (bf16 elementwise + bf16 logits, f32 MXU accumulation) — looser tolerance.
    logits_bf16 = transducer_joint_forward(params, encoder_outputs, predictor_outputs,
                                           out_dtype=jnp.bfloat16, compute_dtype=jnp.bfloat16)
    logits_bf16 = jax.block_until_ready(logits_bf16)
    assert logits_bf16.shape == (B, T, U, vocab_size), logits_bf16.shape
    assert logits_bf16.dtype == jnp.bfloat16
    assert jnp.allclose(logits_bf16.astype(jnp.float32), ref, atol=1e-1, rtol=1e-1), \
        "bf16 mismatch vs JAX reference"

    print("KERNEL_OK")
</pallas_src>

<mosaic_0001>
module attributes {stable_mosaic.version = 11 : i64} {
  func.func @_linear_kernel(%arg0: i32, %arg1: memref<32x64xf32, #tpu.memory_space<vmem>>, %arg2: memref<64x128xf32, #tpu.memory_space<vmem>>, %arg3: memref<1x128xf32, #tpu.memory_space<vmem>>, %arg4: memref<32x128xf32, #tpu.memory_space<vmem>>) attributes {dimension_semantics = [#tpu.dimension_semantics<parallel>], iteration_bounds = array<i64: 1>, scalar_prefetch = 0 : i64, scratch_operands = 0 : i64, tpu.core_type = #tpu.core_type<tc>, window_params = [{transform_indices = @transform_0, window_bounds = array<i64: 32, 64>}, {pipeline_mode = #tpu.pipeline_mode<synchronous>, transform_indices = @transform_1, window_bounds = array<i64: 64, 128>}, {pipeline_mode = #tpu.pipeline_mode<synchronous>, transform_indices = @transform_2, window_bounds = array<i64: 1, 128>}, {transform_indices = @transform_3, window_bounds = array<i64: 32, 128>}]} {
    %c0 = arith.constant 0 : index
    %c0_0 = arith.constant 0 : index
    %0 = vector.load %arg1[%c0, %c0_0] : memref<32x64xf32, #tpu.memory_space<vmem>>, vector<32x64xf32>
    %c0_1 = arith.constant 0 : index
    %c0_2 = arith.constant 0 : index
    %1 = vector.load %arg2[%c0_1, %c0_2] : memref<64x128xf32, #tpu.memory_space<vmem>>, vector<64x128xf32>
    %cst = arith.constant dense<0.000000e+00> : vector<32x128xf32>
    %2 = tpu.matmul %0, %1, %cst {dimension_numbers = #tpu.dot_dimension_numbers<[1], [0], [0], [1], [0, 0, 1, 1], [], []>} : vector<32x64xf32>, vector<64x128xf32>, vector<32x128xf32> -> vector<32x128xf32>
    %c0_3 = arith.constant 0 : index
    %c0_4 = arith.constant 0 : index
    %3 = vector.load %arg3[%c0_3, %c0_4] : memref<1x128xf32, #tpu.memory_space<vmem>>, vector<1x128xf32>
    %4 = vector.broadcast %3 : vector<1x128xf32> to vector<32x128xf32>
    %5 = arith.addf %2, %4 : vector<32x128xf32>
    %c0_5 = arith.constant 0 : index
    %c0_6 = arith.constant 0 : index
    %6 = vector.load %arg4[%c0_5, %c0_6] : memref<32x128xf32, #tpu.memory_space<vmem>>, vector<32x128xf32>
    tpu.vector_store %arg4[%c0_5, %c0_6], %5 {strides = array<i32>} : memref<32x128xf32, #tpu.memory_space<vmem>>, vector<32x128xf32>,
    return
  }
  func.func @transform_0(%arg0: i32) -> (i32, i32) {
    %c0_i32 = arith.constant 0 : i32
    %c0_i32_0 = arith.constant 0 : i32
    return %arg0, %c0_i32 : i32, i32
  }
  func.func @transform_1(%arg0: i32) -> (i32, i32) {
    %c0_i32 = arith.constant 0 : i32
    %c0_i32_0 = arith.constant 0 : i32
    %c0_i32_1 = arith.constant 0 : i32
    return %c0_i32, %c0_i32_0 : i32, i32
  }
  func.func @transform_2(%arg0: i32) -> (i32, i32) {
    %c0_i32 = arith.constant 0 : i32
    %c0_i32_0 = arith.constant 0 : i32
    %c0_i32_1 = arith.constant 0 : i32
    return %c0_i32, %c0_i32_0 : i32, i32
  }
  func.func @transform_3(%arg0: i32) -> (i32, i32) {
    %c0_i32 = arith.constant 0 : i32
    %c0_i32_0 = arith.constant 0 : i32
    return %arg0, %c0_i32 : i32, i32
  }
}

</mosaic_0001>

<llo_original>
// kernel: tpu_custom_call.1
$region0: #{tpu_custom_call.1}
  #allocation0 [shape = 'u32[]', space=smem, size = 0x4, offset = 0x4, fixed_abs, tag = 'smem constant byte address 0x4 - core index']
  #allocation1 [shape = 'u32[144,128]{1,0:T(1,128)}', space=vmem, size = 0x12000, scoped, tag = 'internal scratch']
  %s0 = inlined_call_operand.hbm [shape: f32[32,64], index: 0, kind: input, shape index: {}]
  %s1 = inlined_call_operand.hbm [shape: f32[64,128], index: 1, kind: input, shape index: {}]
  %s2 = inlined_call_operand.vmem [shape: f32[1,128], index: 2, kind: input, shape index: {}]
  %s3 = inlined_call_operand.hbm [shape: f32[32,128], index: 3, kind: output, shape index: {}]
  %s4 = sld [smem:[#allocation0]]
  $region30: #{tpu_custom_call.1} parent=0
    _
  %s6 = ssub.s32 1, %s4
  %s7 = scalar_select 0, %s6, %s4
  $region1: #{tpu_custom_call.1} parent=0
    #allocation2 [shape = 'u8[16384]{0}', space=vmem, size = 0x4000, scoped, tag = 'input window, operand 0, single buffered']
    #allocation3 [shape = 's32[1]{0}', space=sflag, size = 0x4, scoped, tag = 'scoped memory for tpu_custom_call.1']
    #allocation4 [shape = 's32[1]{0}', space=sflag, size = 0x4, scoped, tag = 'scoped memory for tpu_custom_call.1']
    #allocation5 [shape = 'u8[32768]{0}', space=vmem, size = 0x8000, scoped, tag = 'input window, operand 1, single buffered']
    #allocation6 [shape = 's32[1]{0}', space=sflag, size = 0x4, scoped, tag = 'scoped memory for tpu_custom_call.1']
    #allocation7 [shape = 'u8[16384]{0}', space=vmem, size = 0x4000, scoped, tag = 'output window, operand 0, single buffered']
    %8 = vsyncpa [#allocation3], 0
    %9 = vsyncpa [#allocation6], 0
    %10 = vsyncpa [#allocation4], 0
    // Predicated region
    $region2: #{tpu_custom_call.1} parent=1 // pred_check
      _
    $region3: #{tpu_custom_call.1} parent=1 // pred_check_branch
      %12 = sbr.rel (0) target = $region5
    $region4: #{tpu_custom_call.1} parent=1 // pred_region
      %s14 = ssub.s32 512, 512
      %15 = vsyncadd [#allocation3], %s14
      %s16 = sshll.u32 [#allocation2], 4
      %s17 = int_to_ptr.vmem [resolvable:$true] %s16
      %22 = dma.hbm_to_vmem [thread:$0]  %s0, 512, %s17, [#allocation3], 128, 128, 8
    $region5: #{tpu_custom_call.1} parent=1 // pred_fallthru
      _
    // Predicated region
    $region6: #{tpu_custom_call.1} parent=1 // pred_check
      _
    $region7: #{tpu_custom_call.1} parent=1 // pred_check_branch
      %24 = sbr.rel (0) target = $region9
    $region8: #{tpu_custom_call.1} parent=1 // pred_region
      %s26 = ssub.s32 1024, 1024
      %27 = vsyncadd [#allocation6], %s26
      %s28 = sshll.u32 [#allocation5], 4
      %s29 = int_to_ptr.vmem [resolvable:$true] %s28
      %34 = dma.hbm_to_vmem [thread:$0]  %s1, 1024, %s29, [#allocation6], 128, 128, 8
    $region9: #{tpu_custom_call.1} parent=1 // pred_fallthru
      _
    // Predicated region
    $region10: #{tpu_custom_call.1} parent=1 // pred_check
      _
    $region11: #{tpu_custom_call.1} parent=1 // pred_check_branch
      %36 = sbr.rel (0) target = $region13
    $region12: #{tpu_custom_call.1} parent=1 // pred_region
      _
    $region13: #{tpu_custom_call.1} parent=1 // pred_fallthru
      _
    // Predicated region
    $region14: #{tpu_custom_call.1} parent=1 // pred_check
      _
    $region15: #{tpu_custom_call.1} parent=1 // pred_check_branch
      %38 = sbr.rel (0) target = $region17
    $region16: #{tpu_custom_call.1} parent=1 // pred_region
      %39 = dma.done [#allocation3], 512
    $region17: #{tpu_custom_call.1} parent=1 // pred_fallthru
      _
    // Predicated region
    $region18: #{tpu_custom_call.1} parent=1 // pred_check
      _
    $region19: #{tpu_custom_call.1} parent=1 // pred_check_branch
      %41 = sbr.rel (0) target = $region21
    $region20: #{tpu_custom_call.1} parent=1 // pred_region
      %42 = dma.done [#allocation6], 1024
    $region21: #{tpu_custom_call.1} parent=1 // pred_fallthru
      _
    %v43 = vld [vmem:[#allocation2] sm:$0xff]
    %v44 = vld [vmem:[#allocation2 + $0x8] sm:$0xff]
    %v45 = vld [vmem:[#allocation2 + $0x10] sm:$0xff]
    %v46 = vld [vmem:[#allocation2 + $0x18] sm:$0xff]
    %v47 = vld [vmem:[#allocation5] sm:$0xff]
    %v48 = vld [vmem:[#allocation5 + $0x8] sm:$0xff]
    %v49 = vld [vmem:[#allocation5 + $0x10] sm:$0xff]
    %v50 = vld [vmem:[#allocation5 + $0x18] sm:$0xff]
    %v51 = vld [vmem:[#allocation5 + $0x20] sm:$0xff]
    %v52 = vld [vmem:[#allocation5 + $0x28] sm:$0xff]
    %v53 = vld [vmem:[#allocation5 + $0x30] sm:$0xff]
    %v54 = vld [vmem:[#allocation5 + $0x38] sm:$0xff]
    %v55 = vld [vmem:[%s2] sm:$0x1]
    %v57 = vlaneseq
    %v58 = vshrl.u32 %v57, 7
    %v59 = vsub.s32 0, %v58
    %v60 = vrot.slane %v55, %v59
    %vm62 = vcmask 523264
    %v64 = vsel %vm62, %v43, 0
    %v67 = vsel %vm62, %v44, 0
    %v70 = vsel %vm62, %v45, 0
    %v73 = vsel %vm62, %v46, 0
    %75 = vmatprep.subr.mxu0 0.0
    %76 = vmatpush1.msra.mxu0 %v47
    %77 = vmatprep.subr.mxu0 0.0
    %78 = vmatpush1.msra.mxu0 %v48
    %79 = vmatprep.subr.mxu0 0.0
    %80 = vmatpush1.msra.mxu0 %v49
    %81 = vmatprep.subr.mxu0 0.0
    %82 = vmatpush1.msra.mxu0 %v50
    %83 = vmatprep.subr.mxu0 0.0
    %84 = vmatpush1.msra.mxu0 %v51
    %85 = vmatprep.subr.mxu0 0.0
    %86 = vmatpush1.msra.mxu0 %v52
    %87 = vmatprep.subr.mxu0 0.0
    %88 = vmatpush1.msra.mxu0 %v53
    %89 = vmatprep.subr.mxu0 0.0
    %90 = vmatpush1.msra.mxu0 %v54
    %91 = vmatprep.subr.mxu0 0.0
    %92 = vmatpush1.msra.mxu0 0.0
    %93 = vmatprep.subr.mxu0 0.0
    %94 = vmatpush1.msra.mxu0 0.0
    %95 = vmatprep.subr.mxu0 0.0
    %96 = vmatpush1.msra.mxu0 0.0
    %97 = vmatprep.subr.mxu0 0.0
    %98 = vmatpush1.msra.mxu0 0.0
    %99 = vmatprep.subr.mxu0 0.0
    %100 = vmatpush1.msra.mxu0 0.0
    %101 = vmatprep.subr.mxu0 0.0
    %102 = vmatpush1.msra.mxu0 0.0
    %103 = vmatprep.subr.mxu0 0.0
    %104 = vmatpush1.msra.mxu0 0.0
    %105 = vmatprep.subr.mxu0 0.0
    %106 = vmatpush1.msra.mxu0 0.0
    %107 = vmatprep.subr.mxu0 0.0
    %108 = vmatpush1.msra.mxu0 0.0
    %109 = vmatprep.subr.mxu0 0.0
    %110 = vmatpush1.msra.mxu0 0.0
    %111 = vmatprep.subr.mxu0 0.0
    %112 = vmatpush1.msra.mxu0 0.0
    %113 = vmatprep.subr.mxu0 0.0
    %114 = vmatpush1.msra.mxu0 0.0
    %115 = vmatprep.subr.mxu0 0.0
    %116 = vmatpush1.msra.mxu0 0.0
    %117 = vmatprep.subr.mxu0 0.0
    %118 = vmatpush1.msra.mxu0 0.0
    %119 = vmatprep.subr.mxu0 0.0
    %120 = vmatpush1.msra.mxu0 0.0
    %121 = vmatprep.subr.mxu0 0.0
    %122 = vmatpush1.msra.mxu0 0.0
    %123 = vmatprep.subr.mxu0 0.0
    %124 = vmatpush1.msra.mxu0 0.0
    %125 = vmatprep.subr.mxu0 0.0
    %126 = vmatpush1.msra.mxu0 0.0
    %127 = vmatprep.subr.mxu0 0.0
    %128 = vmatpush1.msra.mxu0 0.0
    %129 = vmatprep.subr.mxu0 0.0
    %130 = vmatpush1.msra.mxu0 0.0
    %131 = vmatprep.subr.mxu0 0.0
    %132 = vmatpush1.msra.mxu0 0.0
    %133 = vmatprep.subr.mxu0 0.0
    %134 = vmatpush1.msra.mxu0 0.0
    %135 = vmatprep.subr.mxu0 0.0
    %136 = vmatpush1.msra.mxu0 0.0
    %137 = vmatprep.subr.mxu0 0.0
    %138 = vmatpush1.msra.mxu0 0.0
    %139 = vmatprep.mubr.f32.mxu0 0.0
    %140 = vmatmul.mubr.f32.gmra.mrb[0].mxu0 %v64
    %v141 = vpop.f32.mrb[0].mxu0
    %v142 = vadd.f32 %v60, %v141
    %v143 = vpop.f32.mrb[0].mxu0
    %144 = vmatprep.mubr.f32.mxu0 0.0
    %145 = vmatmul.mubr.f32.gmra.mrb[0].mxu0 %v67
    %v146 = vpop.f32.mrb[0].mxu0
    %v147 = vadd.f32 %v60, %v146
    %v148 = vpop.f32.mrb[0].mxu0
    %149 = vmatprep.mubr.f32.mxu0 0.0
    %150 = vmatmul.mubr.f32.gmra.mrb[0].mxu0 %v70
    %v151 = vpop.f32.mrb[0].mxu0
    %v152 = vadd.f32 %v60, %v151
    %v153 = vpop.f32.mrb[0].mxu0
    %154 = vmatprep.mubr.f32.mxu0 0.0
    %155 = vmatmul.mubr.f32.gmra.mrb[0].mxu0 %v73
    %v156 = vpop.f32.mrb[0].mxu0
    %v157 = vadd.f32 %v60, %v156
    %v158 = vpop.f32.mrb[0].mxu0
    %159 = vdwg.mxu0
    %160 = vst [vmem:[#allocation7] sm:$0xff] %v142
    %161 = vst [vmem:[#allocation7 + $0x8] sm:$0xff] %v147
    %162 = vst [vmem:[#allocation7 + $0x10] sm:$0xff] %v152
    %163 = vst [vmem:[#allocation7 + $0x18] sm:$0xff] %v157
    // Predicated region
    $region22: #{tpu_custom_call.1} parent=1 // pred_check
      _
    $region23: #{tpu_custom_call.1} parent=1 // pred_check_branch
      %165 = sbr.rel (0) target = $region25
    $region24: #{tpu_custom_call.1} parent=1 // pred_region
      %s167 = ssub.s32 512, 512
      %168 = vsyncadd [#allocation4], %s167
      %s169 = sshll.u32 [#allocation7], 4
      %s170 = int_to_ptr.vmem [resolvable:$true] %s169
      %175 = dma.vmem_to_hbm [thread:$0]  %s170, 512, %s3, [#allocation4], 128, 128, 8
    $region25: #{tpu_custom_call.1} parent=1 // pred_fallthru
      _
    // Predicated region
    $region26: #{tpu_custom_call.1} parent=1 // pred_check
      _
    $region27: #{tpu_custom_call.1} parent=1 // pred_check_branch
      %177 = sbr.rel (0) target = $region29
    $region28: #{tpu_custom_call.1} parent=1 // pred_region
      %178 = dma.done [#allocation4], 512
    $region29: #{tpu_custom_call.1} parent=1 // pred_fallthru
      _
    %179 = vsyncpa [#allocation3], 1
    %180 = vsyncpa [#allocation6], 1
    %181 = vsyncpa [#allocation4], 1

</llo_original>
